<compile_context>
chip_gen: v5e
topology: v5e:2x2
jax: 0.10.0
libtpu: 0.0.40
codegen_flags: <defaults>
</compile_context>

<pallas_src>
import jax
import jax.numpy as jnp
from jax.experimental import pallas as pl
from jax.experimental.pallas import tpu as pltpu


def _attention_weighting_kernel(feat_ref, w_ref, b_ref, stacked_ref, out_ref):
    # Linear: (TB, D) @ (D, C) + (1, C) -> (TB, C)   (MXU matmul, f32 acc)
    logits = jnp.dot(
        feat_ref[...], w_ref[...], preferred_element_type=jnp.float32
    ) + b_ref[...].astype(jnp.float32)

    # Softmax over the classifier axis (PyTorch dim=1), numerically stable.
    m = jnp.max(logits, axis=-1, keepdims=True)
    e = jnp.exp(logits - m)
    denom = jnp.sum(e, axis=-1, keepdims=True)
    attn = e * pl.reciprocal(denom, approx=True)  # (TB, C)

    # Weighted combination, unrolled over the (small) classifier axis:
    #   out[b, n] = sum_c attn[b, c] * stacked[c, b, n]
    num_classifiers = stacked_ref.shape[0]
    acc = attn[:, 0:1] * stacked_ref[0].astype(jnp.float32)      # (TB, N)
    for c in range(1, num_classifiers):
        acc = acc + attn[:, c:c + 1] * stacked_ref[c].astype(jnp.float32)

    out_ref[...] = acc.astype(out_ref.dtype)


def _round_up(x, m):
    return ((x + m - 1) // m) * m


def attention_weighting(features, w, b, classifiers_outputs, *, block_b=256):
    """features: (B, D); w: (D, C); b: (C,);
    classifiers_outputs: list of C arrays of shape (B, N)  ->  (B, N)

    (PyTorch Linear weight is (C, D); `w` is its transpose (D, C).)
    """
    B, D = features.shape
    C = w.shape[1]
    assert len(classifiers_outputs) == C
    N = classifiers_outputs[0].shape[-1]

    # Stack along axis=0 -> (C, B, N): puts the big tileable B axis on the
    # sublane dimension (dense DMA / VMEM tiles) with no extra transpose.
    stacked = jnp.stack(classifiers_outputs, axis=0)

    # Batch tile: as large as block_b, multiple of 8 (sublane constraint).
    tb = min(block_b, _round_up(B, 8))
    b_pad = _round_up(B, tb)
    if b_pad != B:
        features = jnp.pad(features, ((0, b_pad - B), (0, 0)))
        stacked = jnp.pad(stacked, ((0, 0), (0, b_pad - B), (0, 0)))

    b2 = b.reshape(1, C)

    out = pl.pallas_call(
        _attention_weighting_kernel,
        out_shape=jax.ShapeDtypeStruct((b_pad, N), jnp.float32),
        grid=(b_pad // tb,),
        in_specs=[
            pl.BlockSpec((tb, D), lambda i: (i, 0)),       # features tile
            pl.BlockSpec((D, C), lambda i: (0, 0)),        # weight (resident)
            pl.BlockSpec((1, C), lambda i: (0, 0)),        # bias   (resident)
            pl.BlockSpec((C, tb, N), lambda i: (0, i, 0)),  # stacked tile
        ],
        out_specs=pl.BlockSpec((tb, N), lambda i: (i, 0)),
        compiler_params=pltpu.CompilerParams(
            dimension_semantics=("parallel",),  # megacore sharding on v7x
        ),
    )(features, w, b2, stacked)

    return out[:B] if b_pad != B else out


def _reference(features, w, b, classifiers_outputs):
    logits = features @ w + b[None, :]
    attn = jax.nn.softmax(logits, axis=1)
    stacked = jnp.stack(classifiers_outputs, axis=1)  # (B, C, N) as in PyTorch
    return jnp.einsum("bc,bcn->bn", attn, stacked)


if __name__ == "__main__":
    # Small shapes consistent with the module's forward.
    B, D, C, N = 8, 32, 3, 16  # batch, feature_dim, num_classifiers, num_classes

    key = jax.random.PRNGKey(0)
    k_feat, k_w, k_b, k_out = jax.random.split(key, 4)

    features = jax.random.normal(k_feat, (B, D), dtype=jnp.float32)
    # Deterministic parameter init (synthetic; not loaded from a checkpoint).
    w = jax.random.normal(k_w, (D, C), dtype=jnp.float32) * 0.05
    b = jax.random.normal(k_b, (C,), dtype=jnp.float32) * 0.05
    # classifiers_outputs is a list of C tensors (B, N).
    classifiers_outputs = [
        jax.random.normal(jax.random.fold_in(k_out, i), (B, N), dtype=jnp.float32)
        for i in range(C)
    ]

    out = attention_weighting(features, w, b, classifiers_outputs)
    out = jax.block_until_ready(out)

    ref = _reference(features, w, b, classifiers_outputs)
    assert out.shape == (B, N)
    # approx=True reciprocal in softmax -> allow ~1e-3 relative deviation.
    assert jnp.allclose(out, ref, atol=5e-3, rtol=5e-3)

    # Also exercise a batch that is not a multiple of the tile (padding path).
    B2 = 13
    feats2 = jax.random.normal(jax.random.fold_in(key, 7), (B2, D), jnp.float32)
    outs2 = [
        jax.random.normal(jax.random.fold_in(key, 100 + i), (B2, N), jnp.float32)
        for i in range(C)
    ]
    out2 = jax.block_until_ready(attention_weighting(feats2, w, b, outs2))
    ref2 = _reference(feats2, w, b, outs2)
    assert out2.shape == (B2, N)
    assert jnp.allclose(out2, ref2, atol=5e-3, rtol=5e-3)

    print("KERNEL_OK")
</pallas_src>

<mosaic_0001>
module attributes {stable_mosaic.version = 11 : i64} {
  func.func @_attention_weighting_kernel(%arg0: i32, %arg1: memref<8x32xf32, #tpu.memory_space<vmem>>, %arg2: memref<32x3xf32, #tpu.memory_space<vmem>>, %arg3: memref<1x3xf32, #tpu.memory_space<vmem>>, %arg4: memref<3x8x16xf32, #tpu.memory_space<vmem>>, %arg5: memref<8x16xf32, #tpu.memory_space<vmem>>) attributes {dimension_semantics = [#tpu.dimension_semantics<parallel>], iteration_bounds = array<i64: 1>, scalar_prefetch = 0 : i64, scratch_operands = 0 : i64, tpu.core_type = #tpu.core_type<tc>, window_params = [{transform_indices = @transform_0, window_bounds = array<i64: 8, 32>}, {pipeline_mode = #tpu.pipeline_mode<synchronous>, transform_indices = @transform_1, window_bounds = array<i64: 32, 3>}, {pipeline_mode = #tpu.pipeline_mode<synchronous>, transform_indices = @transform_2, window_bounds = array<i64: 1, 3>}, {transform_indices = @transform_3, window_bounds = array<i64: 3, 8, 16>}, {transform_indices = @transform_4, window_bounds = array<i64: 8, 16>}]} {
    %c0 = arith.constant 0 : index
    %c0_0 = arith.constant 0 : index
    %0 = vector.load %arg1[%c0, %c0_0] : memref<8x32xf32, #tpu.memory_space<vmem>>, vector<8x32xf32>
    %c0_1 = arith.constant 0 : index
    %c0_2 = arith.constant 0 : index
    %1 = vector.load %arg2[%c0_1, %c0_2] : memref<32x3xf32, #tpu.memory_space<vmem>>, vector<32x3xf32>
    %cst = arith.constant dense<0.000000e+00> : vector<8x3xf32>
    %2 = tpu.matmul %0, %1, %cst {dimension_numbers = #tpu.dot_dimension_numbers<[1], [0], [0], [1], [0, 0, 1, 1], [], []>} : vector<8x32xf32>, vector<32x3xf32>, vector<8x3xf32> -> vector<8x3xf32>
    %c0_3 = arith.constant 0 : index
    %c0_4 = arith.constant 0 : index
    %3 = vector.load %arg3[%c0_3, %c0_4] : memref<1x3xf32, #tpu.memory_space<vmem>>, vector<1x3xf32>
    %4 = vector.broadcast %3 : vector<1x3xf32> to vector<8x3xf32>
    %5 = arith.addf %2, %4 : vector<8x3xf32>
    %cst_5 = arith.constant dense<0xFF800000> : vector<8xf32>
    %6 = vector.multi_reduction <maximumf>, %5, %cst_5 [1] : vector<8x3xf32> to vector<8xf32>
    %7 = vector.shape_cast %6 : vector<8xf32> to vector<8x1xf32>
    %8 = vector.broadcast %7 : vector<8x1xf32> to vector<8x3xf32>
    %9 = arith.subf %5, %8 : vector<8x3xf32>
    %10 = math.exp %9 : vector<8x3xf32>
    %cst_6 = arith.constant dense<0.000000e+00> : vector<8xf32>
    %11 = vector.multi_reduction <add>, %10, %cst_6 [1] : vector<8x3xf32> to vector<8xf32>
    %12 = vector.shape_cast %11 : vector<8xf32> to vector<8x1xf32>
    %13 = tpu.reciprocal %12 {approx = true} : vector<8x1xf32> -> vector<8x1xf32>
    %14 = vector.broadcast %13 : vector<8x1xf32> to vector<8x3xf32>
    %15 = arith.mulf %10, %14 : vector<8x3xf32>
    %16 = vector.extract_strided_slice %15 {offsets = [0, 0], sizes = [8, 1], strides = [1, 1]} : vector<8x3xf32> to vector<8x1xf32>
    %c0_7 = arith.constant 0 : index
    %c0_8 = arith.constant 0 : index
    %c0_9 = arith.constant 0 : index
    %17 = vector.load %arg4[%c0_7, %c0_8, %c0_9] : memref<3x8x16xf32, #tpu.memory_space<vmem>>, vector<1x8x16xf32>
    %18 = vector.shape_cast %17 : vector<1x8x16xf32> to vector<8x16xf32>
    %19 = vector.broadcast %16 : vector<8x1xf32> to vector<8x16xf32>
    %20 = arith.mulf %19, %18 : vector<8x16xf32>
    %21 = vector.extract_strided_slice %15 {offsets = [0, 1], sizes = [8, 1], strides = [1, 1]} : vector<8x3xf32> to vector<8x1xf32>
    %c1 = arith.constant 1 : index
    %c0_10 = arith.constant 0 : index
    %c0_11 = arith.constant 0 : index
    %22 = vector.load %arg4[%c1, %c0_10, %c0_11] : memref<3x8x16xf32, #tpu.memory_space<vmem>>, vector<1x8x16xf32>
    %23 = vector.shape_cast %22 : vector<1x8x16xf32> to vector<8x16xf32>
    %24 = vector.broadcast %21 : vector<8x1xf32> to vector<8x16xf32>
    %25 = arith.mulf %24, %23 : vector<8x16xf32>
    %26 = arith.addf %20, %25 : vector<8x16xf32>
    %27 = vector.extract_strided_slice %15 {offsets = [0, 2], sizes = [8, 1], strides = [1, 1]} : vector<8x3xf32> to vector<8x1xf32>
    %c2 = arith.constant 2 : index
    %c0_12 = arith.constant 0 : index
    %c0_13 = arith.constant 0 : index
    %28 = vector.load %arg4[%c2, %c0_12, %c0_13] : memref<3x8x16xf32, #tpu.memory_space<vmem>>, vector<1x8x16xf32>
    %29 = vector.shape_cast %28 : vector<1x8x16xf32> to vector<8x16xf32>
    %30 = vector.broadcast %27 : vector<8x1xf32> to vector<8x16xf32>
    %31 = arith.mulf %30, %29 : vector<8x16xf32>
    %32 = arith.addf %26, %31 : vector<8x16xf32>
    %c0_14 = arith.constant 0 : index
    %c0_15 = arith.constant 0 : index
    %33 = vector.load %arg5[%c0_14, %c0_15] : memref<8x16xf32, #tpu.memory_space<vmem>>, vector<8x16xf32>
    tpu.vector_store %arg5[%c0_14, %c0_15], %32 {strides = array<i32>} : memref<8x16xf32, #tpu.memory_space<vmem>>, vector<8x16xf32>,
    return
  }
  func.func @transform_0(%arg0: i32) -> (i32, i32) {
    %c0_i32 = arith.constant 0 : i32
    %c0_i32_0 = arith.constant 0 : i32
    return %arg0, %c0_i32 : i32, i32
  }
  func.func @transform_1(%arg0: i32) -> (i32, i32) {
    %c0_i32 = arith.constant 0 : i32
    %c0_i32_0 = arith.constant 0 : i32
    %c0_i32_1 = arith.constant 0 : i32
    return %c0_i32, %c0_i32_0 : i32, i32
  }
  func.func @transform_2(%arg0: i32) -> (i32, i32) {
    %c0_i32 = arith.constant 0 : i32
    %c0_i32_0 = arith.constant 0 : i32
    %c0_i32_1 = arith.constant 0 : i32
    return %c0_i32, %c0_i32_0 : i32, i32
  }
  func.func @transform_3(%arg0: i32) -> (i32, i32, i32) {
    %c0_i32 = arith.constant 0 : i32
    %c0_i32_0 = arith.constant 0 : i32
    %c0_i32_1 = arith.constant 0 : i32
    return %c0_i32, %arg0, %c0_i32_0 : i32, i32, i32
  }
  func.func @transform_4(%arg0: i32) -> (i32, i32) {
    %c0_i32 = arith.constant 0 : i32
    %c0_i32_0 = arith.constant 0 : i32
    return %arg0, %c0_i32 : i32, i32
  }
}

</mosaic_0001>

<llo_original>
// kernel: tpu_custom_call.1
$region0: #{tpu_custom_call.1}
  #allocation0 [shape = 'u32[]', space=smem, size = 0x4, offset = 0x4, fixed_abs, tag = 'smem constant byte address 0x4 - core index']
  #allocation1 [shape = 'u32[72,128]{1,0:T(1,128)}', space=vmem, size = 0x9000, scoped, tag = 'internal scratch']
  %s0 = inlined_call_operand.vmem [shape: f32[8,32], index: 0, kind: input, shape index: {}]
  %s1 = inlined_call_operand.vmem [shape: f32[32,3], index: 1, kind: input, shape index: {}]
  %s2 = inlined_call_operand.vmem [shape: f32[1,3], index: 2, kind: input, shape index: {}]
  %s3 = inlined_call_operand.vmem [shape: f32[3,8,16], index: 3, kind: input, shape index: {}]
  %s4 = inlined_call_operand.hbm [shape: f32[8,16], index: 4, kind: output, shape index: {}]
  %s5 = sld [smem:[#allocation0]]
  $region26: #{tpu_custom_call.1} parent=0
    _
  %s7 = ssub.s32 1, %s5
  %s8 = scalar_select 0, %s7, %s5
  $region1: #{tpu_custom_call.1} parent=0
    #allocation2 [shape = 'u8[4096]{0}', space=vmem, size = 0x1000, scoped, tag = 'output window, operand 0, single buffered']
    #allocation3 [shape = 's32[1]{0}', space=sflag, size = 0x4, scoped, tag = 'scoped memory for tpu_custom_call.1']
    %9 = vsyncpa [#allocation3], 0
    // Predicated region
    $region2: #{tpu_custom_call.1} parent=1 // pred_check
      _
    $region3: #{tpu_custom_call.1} parent=1 // pred_check_branch
      %11 = sbr.rel (0) target = $region5
    $region4: #{tpu_custom_call.1} parent=1 // pred_region
      _
    $region5: #{tpu_custom_call.1} parent=1 // pred_fallthru
      _
    // Predicated region
    $region6: #{tpu_custom_call.1} parent=1 // pred_check
      _
    $region7: #{tpu_custom_call.1} parent=1 // pred_check_branch
      %13 = sbr.rel (0) target = $region9
    $region8: #{tpu_custom_call.1} parent=1 // pred_region
      _
    $region9: #{tpu_custom_call.1} parent=1 // pred_fallthru
      _
    // Predicated region
    $region10: #{tpu_custom_call.1} parent=1 // pred_check
      _
    $region11: #{tpu_custom_call.1} parent=1 // pred_check_branch
      %15 = sbr.rel (0) target = $region13
    $region12: #{tpu_custom_call.1} parent=1 // pred_region
      _
    $region13: #{tpu_custom_call.1} parent=1 // pred_fallthru
      _
    // Predicated region
    $region14: #{tpu_custom_call.1} parent=1 // pred_check
      _
    $region15: #{tpu_custom_call.1} parent=1 // pred_check_branch
      %17 = sbr.rel (0) target = $region17
    $region16: #{tpu_custom_call.1} parent=1 // pred_region
      _
    $region17: #{tpu_custom_call.1} parent=1 // pred_fallthru
      _
    %v18 = vld [vmem:[%s0] sm:$0xff]
    %v19 = vld [vmem:[%s1] sm:$0xff]
    %v20 = vld [vmem:[%s1 + $0x8] sm:$0xff]
    %v21 = vld [vmem:[%s1 + $0x10] sm:$0xff]
    %v22 = vld [vmem:[%s1 + $0x18] sm:$0xff]
    %v23 = vld [vmem:[%s2] sm:$0x1]
    %v25 = vperm.slane %v23, 0
    %vm27 = vcmask 261120
    %v29 = vsel %vm27, %v18, 0
    %31 = vmatpush.msra.mxu0 0.0
    %32 = vmatpush.msra.mxu0 0.0
    %33 = vmatpush.msra.mxu0 0.0
    %34 = vmatpush.msra.mxu0 0.0
    %35 = vmatpush.msra.mxu0 0.0
    %36 = vmatpush.msra.mxu0 0.0
    %37 = vmatpush.msra.mxu0 0.0
    %38 = vmatpush.msra.mxu0 0.0
    %39 = vmatpush.msra.mxu0 0.0
    %40 = vmatpush.msra.mxu0 0.0
    %41 = vmatpush.msra.mxu0 0.0
    %42 = vmatpush.msra.mxu0 0.0
    %43 = vmatpush.msra.mxu0 %v22
    %44 = vmatpush.msra.mxu0 %v21
    %45 = vmatpush.msra.mxu0 %v20
    %46 = vmatpush.msra.mxu0 %v19
    %47 = vmatmul.f32.gmra.mxu0 %v29
    %v48 = vpop.f32.mrf.mxu0
    %v49 = vadd.f32 %v25, %v48
    %50 = vdwg.mxu0
    %vm51 = vcmask 23552
    %v52 = vsel %vm51, %v49, -inf
    %53 = vmax.xlane.f32.xlu0 %v52
    %v54 = vpop.xlane.xlu0 %53
    %v55 = vsub.f32 %v49, %v54
    %v56 = vmul.f32 %v55, 1.442695
    %v57 = vpow.pop %v56
    %v58 = vsel %vm51, %v57, 0.0
    %59 = vadd.xlane.f32.xlu0 %v58
    %v60 = vpop.xlane.xlu0 %59
    %v61 = vrcp.pop %v60
    %v62 = vmul.f32 %v57, %v61
    %v63 = vld [vmem:[%s3] sm:$0xff]
    %65 = vset.pattern.permute.xlu0 0
    %66 = vperm.xlu0 %65, %v62
    %v67 = vpop.permute.xlu0 %66
    %v69 = vmul.f32 %v67, %v63
    %s70 = scalar_lea.vmem %s3, 8
    %v71 = vld [vmem:[%s70] sm:$0xff]
    %72 = vset.pattern.permute.xlu0 1
    %73 = vperm.xlu0 %72, %v62
    %v74 = vpop.permute.xlu0 %73
    %v76 = vmul.f32 %v74, %v71
    %v77 = vadd.f32 %v69, %v76
    %s78 = scalar_lea.vmem %s3, 16
    %v79 = vld [vmem:[%s78] sm:$0xff]
    %80 = vset.pattern.permute.xlu0 2
    %81 = vperm.xlu0 %80, %v62
    %v82 = vpop.permute.xlu0 %81
    %v84 = vmul.f32 %v82, %v79
    %v85 = vadd.f32 %v77, %v84
    %vm86 = vcmask 130048
    %87 = vst.msk [vmem:[#allocation2] sm:$0xff] %vm86, %v85
    // Predicated region
    $region18: #{tpu_custom_call.1} parent=1 // pred_check
      _
    $region19: #{tpu_custom_call.1} parent=1 // pred_check_branch
      %89 = sbr.rel (0) target = $region21
    $region20: #{tpu_custom_call.1} parent=1 // pred_region
      %91 = vsyncadd [#allocation3], 0
      %s93 = sshll.u32 [#allocation2], 4
      %s94 = int_to_ptr.vmem [resolvable:$true] %s93
      %s95 = sshll.u32 %s4, 4
      %s96 = int_to_ptr.hbm [resolvable:$true] %s95
      %98 = dma.vmem_to_hbm [thread:$0]  %s94, 128, %s96, [#allocation3]
    $region21: #{tpu_custom_call.1} parent=1 // pred_fallthru
      _
    // Predicated region
    $region22: #{tpu_custom_call.1} parent=1 // pred_check
      _
    $region23: #{tpu_custom_call.1} parent=1 // pred_check_branch
      %100 = sbr.rel (0) target = $region25
    $region24: #{tpu_custom_call.1} parent=1 // pred_region
      %102 = dma.done [#allocation3], 128
    $region25: #{tpu_custom_call.1} parent=1 // pred_fallthru
      _
    %103 = vsyncpa [#allocation3], 1

</llo_original>
